<compile_context>
chip_gen: v7x
topology: tpu7x:2x2x1
jax: 0.10.0
libtpu: 0.0.40
codegen_flags: <defaults>
</compile_context>

<pallas_src>
import functools
import math

import jax
import jax.numpy as jnp
from jax.experimental import pallas as pl
from jax.experimental.pallas import tpu as pltpu

EPS = 1e-5
_LANES = 128
_MAX_PACK_LANES = 1024          # cap on lcm(C, 128) packing width


def _cdiv(a, b):
    return (a + b - 1) // b


def _round_up(a, b):
    return _cdiv(a, b) * b


def _tpu_generation():
    try:
        kind = jax.devices()[0].device_kind.lower()
    except Exception:
        return 0
    for g in (7, 6, 5, 4):
        if f"v{g}" in kind or f"tpu{g}" in kind:
            return g
    return 0


def _split_hi_lo(x):
    """Split an f32 array into two bf16 components with hi + lo ~= x (rel err ~2^-18)."""
    hi = x.astype(jnp.bfloat16)
    lo = (x - hi.astype(jnp.float32)).astype(jnp.bfloat16)
    return hi, lo


def _packed_ln_kernel(x_ref, w_ref, s_ref, o_ref, *, inv_c):
    # x_ref: (tm, L) lane-dense tile holding G = L // C logical rows per
    #        hardware row (each logical row occupies a contiguous C-lane group).
    # w_ref: (1, L) weight tiled G times (f32).
    # s_ref: (L, L) block-diagonal 0/1 selector in bf16 (exact); x @ S puts,
    #        in every lane, the sum over its own C-lane group.
    x = x_ref[...].astype(jnp.float32)
    s = s_ref[...]
    x2 = x * x
    # hi/lo bf16 split -> 4 native bf16 MXU passes with f32 accumulation.
    x_hi, x_lo = _split_hi_lo(x)
    x2_hi, x2_lo = _split_hi_lo(x2)
    s1 = (jnp.dot(x_hi, s, preferred_element_type=jnp.float32) +
          jnp.dot(x_lo, s, preferred_element_type=jnp.float32))
    s2 = (jnp.dot(x2_hi, s, preferred_element_type=jnp.float32) +
          jnp.dot(x2_lo, s, preferred_element_type=jnp.float32))
    mean = s1 * inv_c
    var = jnp.maximum(s2 * inv_c - mean * mean, 0.0)   # one-pass variance
    inv = jax.lax.rsqrt(var + EPS)                     # EUP slot
    o_ref[...] = (x * inv * w_ref[...]).astype(o_ref.dtype)


def _rowwise_ln_kernel(x_ref, w_ref, o_ref, *, inv_c):
    # Fallback for C >= 128 (or channel counts whose lane-packing would be too
    # wide): plain per-row reduction over the full last dimension.
    x = x_ref[...].astype(jnp.float32)
    s1 = jnp.sum(x, axis=-1, keepdims=True)
    s2 = jnp.sum(x * x, axis=-1, keepdims=True)
    mean = s1 * inv_c
    var = jnp.maximum(s2 * inv_c - mean * mean, 0.0)
    inv = jax.lax.rsqrt(var + EPS)
    o_ref[...] = (x * inv * w_ref[...]).astype(o_ref.dtype)


def _choose_tile_rows(n_rows, row_bytes, target_bytes, align):
    """Row-tile size: ~target_bytes of input, sublane-aligned, with a
    near-balanced (even when possible) block count for v7x's two cores."""
    tm = max(align, (target_bytes // max(row_bytes, 1)) // align * align)
    if tm >= n_rows:
        return n_rows, 1
    nblk = _cdiv(n_rows, tm)
    if nblk % 2:
        nblk += 1                      # even block count keeps both v7x TCs busy
    tm = min(_round_up(_cdiv(n_rows, nblk), align), _round_up(n_rows, align))
    return tm, _cdiv(n_rows, tm)


@jax.jit
def biasfree_layernorm(x, weight):
    """x: (..., C) array, weight: (C,) scale.  Returns same shape/dtype as x."""
    orig_shape = x.shape
    C = orig_shape[-1]
    out_dtype = x.dtype
    itemsize = jnp.dtype(x.dtype).itemsize
    out_itemsize = jnp.dtype(out_dtype).itemsize

    x2d = x.reshape(-1, C)
    M = x2d.shape[0]
    w32 = weight.astype(jnp.float32)

    # Sublane alignment for the input dtype (f32: 8, bf16: 16, int8/fp8: 32).
    align = max(8, 32 // itemsize)

    # Generation-aware tile target: v7x's ~3.2 TB/s HBM needs bigger steps to
    # amortize the fixed per-grid-step overhead.
    gen = _tpu_generation()
    if gen >= 7:
        target_tile_bytes, vmem_limit = 4 << 20, 48 << 20   # 64 MiB physical/TC
    elif gen >= 5:
        target_tile_bytes, vmem_limit = 2 << 20, 64 << 20   # 128 MiB physical
    else:
        target_tile_bytes, vmem_limit = 1 << 20, 32 << 20   # unknown/older: safe

    # Lane-dense packing: L = lcm(C, 128) lanes, G = L // C logical rows per
    # hardware row, so every load/store is a full unmasked vreg.
    L_pack = (C * _LANES) // math.gcd(C, _LANES)
    pack = (C < _LANES) and (L_pack <= _MAX_PACK_LANES)

    pad = 0
    if pack:
        L = L_pack
        G = L // C
        if M % G:
            pad = G - (M % G)          # rare; only needed for the pack reshape
            x2d = jnp.pad(x2d, ((0, pad), (0, 0)))
        Mg = (M + pad) // G
        xp = x2d.reshape(Mg, L)                    # contiguous -> free reshape
        w_in = jnp.tile(w32, (G,)).reshape(1, L)   # weight per packed lane
        grp = jnp.arange(L, dtype=jnp.int32) // C
        S = (grp[:, None] == grp[None, :]).astype(jnp.bfloat16)  # exact 0/1
    else:
        L = C
        Mg = M
        xp = x2d
        w_in = w32.reshape(1, L)
        S = None

    tm, nblk = _choose_tile_rows(Mg, L * itemsize, target_tile_bytes, align)
    grid = (nblk,)

    in_specs = [
        pl.BlockSpec((tm, L), lambda i: (i, 0)),
        pl.BlockSpec((1, L), lambda i: (0, 0)),
    ]
    args = [xp, w_in]
    if pack:
        in_specs.append(pl.BlockSpec((L, L), lambda i: (0, 0)))
        args.append(S)
        kernel = functools.partial(_packed_ln_kernel, inv_c=1.0 / C)
        flops = 4 * 2 * Mg * L * L + 12 * Mg * L
        transcendentals = Mg * L
    else:
        kernel = functools.partial(_rowwise_ln_kernel, inv_c=1.0 / C)
        flops = 12 * Mg * L
        transcendentals = Mg

    bytes_accessed = (xp.size * itemsize + xp.size * out_itemsize
                      + w_in.size * 4 + (S.size * 2 if pack else 0))

    out = pl.pallas_call(
        kernel,
        out_shape=jax.ShapeDtypeStruct((Mg, L), out_dtype),
        grid_spec=pltpu.PrefetchScalarGridSpec(
            num_scalar_prefetch=0,
            grid=grid,
            in_specs=in_specs,
            out_specs=pl.BlockSpec((tm, L), lambda i: (i, 0)),
        ),
        compiler_params=pltpu.CompilerParams(
            dimension_semantics=("parallel",),
            vmem_limit_bytes=vmem_limit,
        ),
        cost_estimate=pl.CostEstimate(
            flops=int(flops),
            transcendentals=int(transcendentals),
            bytes_accessed=int(bytes_accessed),
        ),
    )(*args)

    out2d = out.reshape(M + pad, C)
    if pad:
        out2d = out2d[:M]
    return out2d.reshape(orig_shape)


def _reference(x, weight):
    x32 = x.astype(jnp.float32)
    var = jnp.var(x32, axis=-1, keepdims=True)        # ddof=0 == unbiased=False
    return (x32 / jnp.sqrt(var + EPS) * weight.astype(jnp.float32)).astype(x.dtype)


if __name__ == "__main__":
    key = jax.random.PRNGKey(0)
    kx, kw = jax.random.split(key)

    B, H, W, C = 2, 16, 16, 32                         # (batch, spatial, hidden)
    x = jax.random.normal(kx, (B, H, W, C), dtype=jnp.float32)
    # nn.Parameter init is ones; perturb slightly so the weight path is tested.
    weight = jnp.ones((C,), dtype=jnp.float32) + 0.05 * jax.random.normal(kw, (C,))

    out = biasfree_layernorm(x, weight)
    out = jax.block_until_ready(out)

    ref = _reference(x, weight)
    assert out.shape == x.shape and out.dtype == x.dtype
    max_err = float(jnp.max(jnp.abs(out - ref)))
    assert jnp.allclose(out, ref, atol=2e-5, rtol=2e-5), (
        f"mismatch vs reference (max abs err {max_err})")

    print("KERNEL_OK")
</pallas_src>

<mosaic_0001>
module attributes {stable_mosaic.version = 11 : i64} {
  func.func @_packed_ln_kernel(%arg0: i32, %arg1: memref<128x128xf32, #tpu.memory_space<vmem>>, %arg2: memref<1x128xf32, #tpu.memory_space<vmem>>, %arg3: memref<128x128xbf16, #tpu.memory_space<vmem>>, %arg4: memref<128x128xf32, #tpu.memory_space<vmem>>) attributes {dimension_semantics = [#tpu.dimension_semantics<parallel>], iteration_bounds = array<i64: 1>, scalar_prefetch = 0 : i64, scratch_operands = 0 : i64, tpu.core_type = #tpu.core_type<tc>, window_params = [{transform_indices = @transform_0, window_bounds = array<i64: 128, 128>}, {pipeline_mode = #tpu.pipeline_mode<synchronous>, transform_indices = @transform_1, window_bounds = array<i64: 1, 128>}, {pipeline_mode = #tpu.pipeline_mode<synchronous>, transform_indices = @transform_2, window_bounds = array<i64: 128, 128>}, {transform_indices = @transform_3, window_bounds = array<i64: 128, 128>}]} {
    %c0 = arith.constant 0 : index
    %c0_0 = arith.constant 0 : index
    %0 = vector.load %arg1[%c0, %c0_0] : memref<128x128xf32, #tpu.memory_space<vmem>>, vector<128x128xf32>
    %c0_1 = arith.constant 0 : index
    %c0_2 = arith.constant 0 : index
    %1 = vector.load %arg3[%c0_1, %c0_2] : memref<128x128xbf16, #tpu.memory_space<vmem>>, vector<128x128xbf16>
    %2 = arith.mulf %0, %0 : vector<128x128xf32>
    %3 = arith.truncf %0 : vector<128x128xf32> to vector<128x128xbf16>
    %4 = arith.extf %3 : vector<128x128xbf16> to vector<128x128xf32>
    %5 = arith.subf %0, %4 : vector<128x128xf32>
    %6 = arith.truncf %5 : vector<128x128xf32> to vector<128x128xbf16>
    %7 = arith.truncf %2 : vector<128x128xf32> to vector<128x128xbf16>
    %8 = arith.extf %7 : vector<128x128xbf16> to vector<128x128xf32>
    %9 = arith.subf %2, %8 : vector<128x128xf32>
    %10 = arith.truncf %9 : vector<128x128xf32> to vector<128x128xbf16>
    %cst = arith.constant dense<0.000000e+00> : vector<128x128xf32>
    %11 = tpu.matmul %3, %1, %cst {dimension_numbers = #tpu.dot_dimension_numbers<[1], [0], [0], [1], [0, 0, 1, 1], [], []>} : vector<128x128xbf16>, vector<128x128xbf16>, vector<128x128xf32> -> vector<128x128xf32>
    %cst_3 = arith.constant dense<0.000000e+00> : vector<128x128xf32>
    %12 = tpu.matmul %6, %1, %cst_3 {dimension_numbers = #tpu.dot_dimension_numbers<[1], [0], [0], [1], [0, 0, 1, 1], [], []>} : vector<128x128xbf16>, vector<128x128xbf16>, vector<128x128xf32> -> vector<128x128xf32>
    %13 = arith.addf %11, %12 : vector<128x128xf32>
    %cst_4 = arith.constant dense<0.000000e+00> : vector<128x128xf32>
    %14 = tpu.matmul %7, %1, %cst_4 {dimension_numbers = #tpu.dot_dimension_numbers<[1], [0], [0], [1], [0, 0, 1, 1], [], []>} : vector<128x128xbf16>, vector<128x128xbf16>, vector<128x128xf32> -> vector<128x128xf32>
    %cst_5 = arith.constant dense<0.000000e+00> : vector<128x128xf32>
    %15 = tpu.matmul %10, %1, %cst_5 {dimension_numbers = #tpu.dot_dimension_numbers<[1], [0], [0], [1], [0, 0, 1, 1], [], []>} : vector<128x128xbf16>, vector<128x128xbf16>, vector<128x128xf32> -> vector<128x128xf32>
    %16 = arith.addf %14, %15 : vector<128x128xf32>
    %cst_6 = arith.constant 3.125000e-02 : f32
    %17 = vector.broadcast %cst_6 : f32 to vector<128x128xf32>
    %18 = arith.mulf %13, %17 : vector<128x128xf32>
    %cst_7 = arith.constant 3.125000e-02 : f32
    %19 = vector.broadcast %cst_7 : f32 to vector<128x128xf32>
    %20 = arith.mulf %16, %19 : vector<128x128xf32>
    %21 = arith.mulf %18, %18 : vector<128x128xf32>
    %22 = arith.subf %20, %21 : vector<128x128xf32>
    %cst_8 = arith.constant 0.000000e+00 : f32
    %23 = vector.broadcast %cst_8 : f32 to vector<128x128xf32>
    %24 = arith.maximumf %22, %23 : vector<128x128xf32>
    %cst_9 = arith.constant 9.99999974E-6 : f32
    %25 = vector.broadcast %cst_9 : f32 to vector<128x128xf32>
    %26 = arith.addf %24, %25 : vector<128x128xf32>
    %27 = math.rsqrt %26 : vector<128x128xf32>
    %28 = arith.mulf %0, %27 : vector<128x128xf32>
    %c0_10 = arith.constant 0 : index
    %c0_11 = arith.constant 0 : index
    %29 = vector.load %arg2[%c0_10, %c0_11] : memref<1x128xf32, #tpu.memory_space<vmem>>, vector<1x128xf32>
    %30 = vector.broadcast %29 : vector<1x128xf32> to vector<128x128xf32>
    %31 = arith.mulf %28, %30 : vector<128x128xf32>
    %c0_12 = arith.constant 0 : index
    %c0_13 = arith.constant 0 : index
    %32 = vector.load %arg4[%c0_12, %c0_13] : memref<128x128xf32, #tpu.memory_space<vmem>>, vector<128x128xf32>
    tpu.vector_store %arg4[%c0_12, %c0_13], %31 {strides = array<i32>} : memref<128x128xf32, #tpu.memory_space<vmem>>, vector<128x128xf32>,
    return
  }
  func.func @transform_0(%arg0: i32) -> (i32, i32) {
    %c0_i32 = arith.constant 0 : i32
    %c0_i32_0 = arith.constant 0 : i32
    return %arg0, %c0_i32 : i32, i32
  }
  func.func @transform_1(%arg0: i32) -> (i32, i32) {
    %c0_i32 = arith.constant 0 : i32
    %c0_i32_0 = arith.constant 0 : i32
    %c0_i32_1 = arith.constant 0 : i32
    return %c0_i32, %c0_i32_0 : i32, i32
  }
  func.func @transform_2(%arg0: i32) -> (i32, i32) {
    %c0_i32 = arith.constant 0 : i32
    %c0_i32_0 = arith.constant 0 : i32
    %c0_i32_1 = arith.constant 0 : i32
    return %c0_i32, %c0_i32_0 : i32, i32
  }
  func.func @transform_3(%arg0: i32) -> (i32, i32) {
    %c0_i32 = arith.constant 0 : i32
    %c0_i32_0 = arith.constant 0 : i32
    return %arg0, %c0_i32 : i32, i32
  }
}

</mosaic_0001>

<llo_original>
// kernel: tile.8
$region0: #{tile.8}
  #allocation0 [shape = 's32[1]{0}', space=sflag, size = 0x4, scoped, tag = 'scoped memory for tile.8']
  %s0 = inlined_call_operand.vmem [shape: f32[32], index: 0, kind: input, shape index: {}]
  %s1 = inlined_call_operand.vmem [shape: f32[4,32], index: 1, kind: output, shape index: {}]
  // Predicated region
  $region2: #{tile.8} parent=0 // pred_check
    _
  $region3: #{tile.8} parent=0 // pred_check_branch
    %3 = sbr.rel (0) target = $region5
  $region4: #{tile.8} parent=0 // pred_region
    _
  $region5: #{tile.8} parent=0 // pred_fallthru
    _
  %v4 = vld [vmem:[%s0] ss:$0 sm:$0xff]
  %5 = vst [vmem:[%s1] sm:$0xf] %v4

// kernel: tile.9
$region0: #{tile.9}
  %s0 = inlined_call_operand.vmem [shape: f32[4,32], index: 0, kind: input, shape index: {}]
  %s1 = inlined_call_operand.vmem [shape: f32[1,128], index: 1, kind: output, shape index: {}]
  $region1: #{tile.9} parent=0
    #allocation0 [shape = 'u8[4096]{0}', space=vmem, size = 0x1000, scoped, tag = 'scoped mem for output reshape']
    #allocation1 [shape = 'u8[4096]{0}', space=vmem, size = 0x1000, scoped, tag = 'scoped mem for input reshape']
    %s3 = sshllo.u32 0, 4
    %v4 = vld [vmem:[%s0] sm:%s3]
    %5 = vst [vmem:[#allocation1] sm:%s3] %v4
    %v6 = vld [vmem:[#allocation1] sm:$0x1]
    %vm7 = vcmask 261120
    %8 = vst.msk [vmem:[#allocation0] sm:$0x1] %vm7, %v6
    %s9 = scalar_lea.vmem [#allocation1], 3
    %v10 = vld [vmem:[%s9] sm:$0x1]
    %11 = vrot.lane.b32.xlu0 %v10, 96
    %v12 = vpop.permute.xlu0 %11
    %vm13 = vcmask 1048320
    %14 = vst.msk [vmem:[#allocation0] sm:$0x1] %vm13, %v12
    %s15 = scalar_lea.vmem [#allocation1], 2
    %v16 = vld [vmem:[%s15] sm:$0x1]
    %17 = vrot.lane.b32.xlu0 %v16, 64
    %v18 = vpop.permute.xlu0 %17
    %vm19 = vcmask 785920
    %20 = vst.msk [vmem:[#allocation0] sm:$0x1] %vm19, %v18
    %s21 = scalar_lea.vmem [#allocation1], 1
    %v22 = vld [vmem:[%s21] sm:$0x1]
    %23 = vrot.lane.b32.xlu0 %v22, 32
    %v24 = vpop.permute.xlu0 %23
    %vm25 = vcmask 523520
    %26 = vst.msk [vmem:[#allocation0] sm:$0x1] %vm25, %v24
    %s28 = sshllo.u32 0, 1
    %v30 = vld [vmem:[#allocation0] sm:%s28]
    %s31 = sshllo.u32 0, 1
    %32 = vst [vmem:[%s1] sm:%s31] %v30

// kernel: biasfree_layernorm.1
$region0: #{biasfree_layernorm.1}
  #allocation0 [shape = 'u32[]', space=smem, size = 0x4, offset = 0x4, fixed_abs, tag = 'smem constant byte address 0x4 - core index']
  #allocation1 [shape = 'u32[144,128]{1,0:T(1,128)}', space=vmem, size = 0x12000, scoped, tag = 'internal scratch']
  %s0 = inlined_call_operand.vmem [shape: f32[128,128], index: 0, kind: input, shape index: {}]
  %s1 = inlined_call_operand.vmem [shape: f32[1,128], index: 1, kind: input, shape index: {}]
  %s2 = inlined_call_operand.vmem [shape: bf16[128,128], index: 2, kind: input, shape index: {}]
  %s3 = inlined_call_operand.vmem [shape: f32[128,128], index: 3, kind: output, shape index: {}]
  %s4 = sld [smem:[#allocation0]]
  $region22: #{biasfree_layernorm.1} parent=0
    _
  %s6 = ssub.s32 1, %s4
  %s7 = scalar_select 0, %s6, %s4
  // Predicated region
  $region2: #{biasfree_layernorm.1} parent=0 // pred_check
    _
  $region3: #{biasfree_layernorm.1} parent=0 // pred_check_branch
    %9 = sbr.rel (0) target = $region5
  $region4: #{biasfree_layernorm.1} parent=0 // pred_region
    _
  $region5: #{biasfree_layernorm.1} parent=0 // pred_fallthru
    _
  // Predicated region
  $region6: #{biasfree_layernorm.1} parent=0 // pred_check
    _
  $region7: #{biasfree_layernorm.1} parent=0 // pred_check_branch
    %11 = sbr.rel (0) target = $region9
  $region8: #{biasfree_layernorm.1} parent=0 // pred_region
    _
  $region9: #{biasfree_layernorm.1} parent=0 // pred_fallthru
    _
  // Predicated region
  $region10: #{biasfree_layernorm.1} parent=0 // pred_check
    _
  $region11: #{biasfree_layernorm.1} parent=0 // pred_check_branch
    %13 = sbr.rel (0) target = $region13
  $region12: #{biasfree_layernorm.1} parent=0 // pred_region
    _
  $region13: #{biasfree_layernorm.1} parent=0 // pred_fallthru
    _
  %v15 = vld [vmem:[%s0] sm:$0xff]
  %v16 = vld [vmem:[%s0 + $0x8] sm:$0xff]
  %v17 = vld [vmem:[%s0 + $0x10] sm:$0xff]
  %v18 = vld [vmem:[%s0 + $0x18] sm:$0xff]
  %v19 = vld [vmem:[%s0 + $0x20] sm:$0xff]
  %v20 = vld [vmem:[%s0 + $0x28] sm:$0xff]
  %v21 = vld [vmem:[%s0 + $0x30] sm:$0xff]
  %v22 = vld [vmem:[%s0 + $0x38] sm:$0xff]
  %v23 = vld [vmem:[%s0 + $0x40] sm:$0xff]
  %v24 = vld [vmem:[%s0 + $0x48] sm:$0xff]
  %v25 = vld [vmem:[%s0 + $0x50] sm:$0xff]
  %v26 = vld [vmem:[%s0 + $0x58] sm:$0xff]
  %v27 = vld [vmem:[%s0 + $0x60] sm:$0xff]
  %v28 = vld [vmem:[%s0 + $0x68] sm:$0xff]
  %v29 = vld [vmem:[%s0 + $0x70] sm:$0xff]
  %v30 = vld [vmem:[%s0 + $0x78] sm:$0xff]
  %v31 = vld [vmem:[%s2] sm:$0xf]
  %v32 = vld [vmem:[%s2 + $0x4] sm:$0xf]
  %v33 = vld [vmem:[%s2 + $0x8] sm:$0xf]
  %v34 = vld [vmem:[%s2 + $0xc] sm:$0xf]
  %v35 = vld [vmem:[%s2 + $0x10] sm:$0xf]
  %v36 = vld [vmem:[%s2 + $0x14] sm:$0xf]
  %v37 = vld [vmem:[%s2 + $0x18] sm:$0xf]
  %v38 = vld [vmem:[%s2 + $0x1c] sm:$0xf]
  %v39 = vld [vmem:[%s2 + $0x20] sm:$0xf]
  %v40 = vld [vmem:[%s2 + $0x24] sm:$0xf]
  %v41 = vld [vmem:[%s2 + $0x28] sm:$0xf]
  %v42 = vld [vmem:[%s2 + $0x2c] sm:$0xf]
  %v43 = vld [vmem:[%s2 + $0x30] sm:$0xf]
  %v44 = vld [vmem:[%s2 + $0x34] sm:$0xf]
  %v45 = vld [vmem:[%s2 + $0x38] sm:$0xf]
  %v46 = vld [vmem:[%s2 + $0x3c] sm:$0xf]
  %v47 = vmul.f32 %v15, %v15
  %v48 = vmul.f32 %v16, %v16
  %v49 = vmul.f32 %v17, %v17
  %v50 = vmul.f32 %v18, %v18
  %v51 = vmul.f32 %v19, %v19
  %v52 = vmul.f32 %v20, %v20
  %v53 = vmul.f32 %v21, %v21
  %v54 = vmul.f32 %v22, %v22
  %v55 = vmul.f32 %v23, %v23
  %v56 = vmul.f32 %v24, %v24
  %v57 = vmul.f32 %v25, %v25
  %v58 = vmul.f32 %v26, %v26
  %v59 = vmul.f32 %v27, %v27
  %v60 = vmul.f32 %v28, %v28
  %v61 = vmul.f32 %v29, %v29
  %v62 = vmul.f32 %v30, %v30
  %v63 = vpack.c.bf16 %v16, %v15
  %v64 = vpack.c.bf16 %v18, %v17
  %v65 = vpack.c.bf16 %v20, %v19
  %v66 = vpack.c.bf16 %v22, %v21
  %v67 = vpack.c.bf16 %v24, %v23
  %v68 = vpack.c.bf16 %v26, %v25
  %v69 = vpack.c.bf16 %v28, %v27
  %v70 = vpack.c.bf16 %v30, %v29
  %v71 = vunpack.c.l.bf16 %v63
  %v72 = vunpack.c.h.bf16 %v63
  %v73 = vunpack.c.l.bf16 %v64
  %v74 = vunpack.c.h.bf16 %v64
  %v75 = vunpack.c.l.bf16 %v65
  %v76 = vunpack.c.h.bf16 %v65
  %v77 = vunpack.c.l.bf16 %v66
  %v78 = vunpack.c.h.bf16 %v66
  %v79 = vunpack.c.l.bf16 %v67
  %v80 = vunpack.c.h.bf16 %v67
  %v81 = vunpack.c.l.bf16 %v68
  %v82 = vunpack.c.h.bf16 %v68
  %v83 = vunpack.c.l.bf16 %v69
  %v84 = vunpack.c.h.bf16 %v69
  %v85 = vunpack.c.l.bf16 %v70
  %v86 = vunpack.c.h.bf16 %v70
  %v87 = vsub.f32 %v15, %v71
  %v88 = vsub.f32 %v16, %v72
  %v89 = vsub.f32 %v17, %v73
  %v90 = vsub.f32 %v18, %v74
  %v91 = vsub.f32 %v19, %v75
  %v92 = vsub.f32 %v20, %v76
  %v93 = vsub.f32 %v21, %v77
  %v94 = vsub.f32 %v22, %v78
  %v95 = vsub.f32 %v23, %v79
  %v96 = vsub.f32 %v24, %v80
  %v97 = vsub.f32 %v25, %v81
  %v98 = vsub.f32 %v26, %v82
  %v99 = vsub.f32 %v27, %v83
  %v100 = vsub.f32 %v28, %v84
  %v101 = vsub.f32 %v29, %v85
  %v102 = vsub.f32 %v30, %v86
  %v103 = vpack.c.bf16 %v88, %v87
  %v104 = vpack.c.bf16 %v90, %v89
  %v105 = vpack.c.bf16 %v92, %v91
  %v106 = vpack.c.bf16 %v94, %v93
  %v107 = vpack.c.bf16 %v96, %v95
  %v108 = vpack.c.bf16 %v98, %v97
  %v109 = vpack.c.bf16 %v100, %v99
  %v110 = vpack.c.bf16 %v102, %v101
  %v111 = vpack.c.bf16 %v48, %v47
  %v112 = vpack.c.bf16 %v50, %v49
  %v113 = vpack.c.bf16 %v52, %v51
  %v114 = vpack.c.bf16 %v54, %v53
  %v115 = vpack.c.bf16 %v56, %v55
  %v116 = vpack.c.bf16 %v58, %v57
  %v117 = vpack.c.bf16 %v60, %v59
  %v118 = vpack.c.bf16 %v62, %v61
  %v119 = vunpack.c.l.bf16 %v111
  %v120 = vunpack.c.h.bf16 %v111
  %v121 = vunpack.c.l.bf16 %v112
  %v122 = vunpack.c.h.bf16 %v112
  %v123 = vunpack.c.l.bf16 %v113
  %v124 = vunpack.c.h.bf16 %v113
  %v125 = vunpack.c.l.bf16 %v114
  %v126 = vunpack.c.h.bf16 %v114
  %v127 = vunpack.c.l.bf16 %v115
  %v128 = vunpack.c.h.bf16 %v115
  %v129 = vunpack.c.l.bf16 %v116
  %v130 = vunpack.c.h.bf16 %v116
  %v131 = vunpack.c.l.bf16 %v117
  %v132 = vunpack.c.h.bf16 %v117
  %v133 = vunpack.c.l.bf16 %v118
  %v134 = vunpack.c.h.bf16 %v118
  %v135 = vsub.f32 %v47, %v119
  %v136 = vsub.f32 %v48, %v120
  %v137 = vsub.f32 %v49, %v121
  %v138 = vsub.f32 %v50, %v122
  %v139 = vsub.f32 %v51, %v123
  %v140 = vsub.f32 %v52, %v124
  %v141 = vsub.f32 %v53, %v125
  %v142 = vsub.f32 %v54, %v126
  %v143 = vsub.f32 %v55, %v127
  %v144 = vsub.f32 %v56, %v128
  %v145 = vsub.f32 %v57, %v129
  %v146 = vsub.f32 %v58, %v130
  %v147 = vsub.f32 %v59, %v131
  %v148 = vsub.f32 %v60, %v132
  %v149 = vsub.f32 %v61, %v133
  %v150 = vsub.f32 %v62, %v134
  %v151 = vpack.c.bf16 %v136, %v135
  %v152 = vpack.c.bf16 %v138, %v137
  %v153 = vpack.c.bf16 %v140, %v139
  %v154 = vpack.c.bf16 %v142, %v141
  %v155 = vpack.c.bf16 %v144, %v143
  %v156 = vpack.c.bf16 %v146, %v145
  %v157 = vpack.c.bf16 %v148, %v147
  %v158 = vpack.c.bf16 %v150, %v149
  %v175 = vunpack.c.l.b16 %v31
  %v176 = vunpack.c.l.b16 %v32
  %v177 = vunpack.c.l.b16 %v33
  %v178 = vunpack.c.l.b16 %v34
  %v179 = vunpack.c.l.b16 %v35
  %v180 = vunpack.c.l.b16 %v36
  %v181 = vunpack.c.l.b16 %v37
  %v182 = vunpack.c.l.b16 %v38
  %v183 = vunpack.c.l.b16 %v39
  %v184 = vunpack.c.l.b16 %v40
  %v185 = vunpack.c.l.b16 %v41
  %v186 = vunpack.c.l.b16 %v42
  %v187 = vunpack.c.l.b16 %v43
  %v188 = vunpack.c.l.b16 %v44
  %v189 = vunpack.c.l.b16 %v45
  %v190 = vunpack.c.l.b16 %v46
  %v191 = vpack.c.b16 %v176, %v175
  %v192 = vpack.c.b16 %v178, %v177
  %v193 = vpack.c.b16 %v180, %v179
  %v194 = vpack.c.b16 %v182, %v181
  %v195 = vpack.c.b16 %v184, %v183
  %v196 = vpack.c.b16 %v186, %v185
  %v197 = vpack.c.b16 %v188, %v187
  %v198 = vpack.c.b16 %v190, %v189
  %207 = vmatprep.subr.bf16.mxu0 0
  %208 = vmatpush1.bf16.msra.mxu0 %v191
  %209 = vmatprep.subr.bf16.mxu0 0
  %210 = vmatpush1.bf16.msra.mxu0 %v192
  %211 = vmatprep.subr.bf16.mxu0 0
  %212 = vmatpush1.bf16.msra.mxu0 %v193
  %213 = vmatprep.subr.bf16.mxu0 0
  %214 = vmatpush1.bf16.msra.mxu0 %v194
  %215 = vmatprep.subr.bf16.mxu0 0
  %216 = vmatpush1.bf16.msra.mxu0 %v195
  %217 = vmatprep.subr.bf16.mxu0 0
  %218 = vmatpush1.bf16.msra.mxu0 %v196
  %219 = vmatprep.subr.bf16.mxu0 0
  %220 = vmatpush1.bf16.msra.mxu0 %v197
  %221 = vmatprep.subr.bf16.mxu0 0
  %222 = vmatpush1.bf16.msra.mxu0 %v198
  %223 = vmatprep.subr.bf16.mxu0 0
  %224 = vmatpush1.bf16.msra.mxu0 0
  %225 = vmatprep.subr.bf16.mxu0 0
  %226 = vmatpush1.bf16.msra.mxu0 0
  %227 = vmatprep.subr.bf16.mxu0 0
  %228 = vmatpush1.bf16.msra.mxu0 0
  %229 = vmatprep.subr.bf16.mxu0 0
  %230 = vmatpush1.bf16.msra.mxu0 0
  %231 = vmatprep.subr.bf16.mxu0 0
  %232 = vmatpush1.bf16.msra.mxu0 0
  %233 = vmatprep.subr.bf16.mxu0 0
  %234 = vmatpush1.bf16.msra.mxu0 0
  %235 = vmatprep.subr.bf16.mxu0 0
  %236 = vmatpush1.bf16.msra.mxu0 0
  %237 = vmatprep.subr.bf16.mxu0 0
  %238 = vmatpush1.bf16.msra.mxu0 0
  %239 = vmatprep.mubr.bf16.mxu0 0
  %240 = vmatmul.mubr.bf16.gmra.mrb[0].mxu0 %v103
  %v241 = vpop.f32.mrb[0].mxu0
  %v242 = vadd.f32 0.0, %v241
  %v243 = vpop.f32.mrb[0].mxu0
  %v244 = vpop.f32.mrb[0].mxu0
  %v245 = vadd.f32 0.0, %v244
  %v246 = vpop.f32.mrb[0].mxu0
  %247 = vmatprep.mubr.bf16.mxu0 0
  %248 = vmatmul.mubr.bf16.gmra.mrb[0].mxu0 %v104
  %v249 = vpop.f32.mrb[0].mxu0
  %v250 = vadd.f32 0.0, %v249
  %v251 = vpop.f32.mrb[0].mxu0
  %v252 = vpop.f32.mrb[0].mxu0
  %v253 = vadd.f32 0.0, %v252
  %v254 = vpop.f32.mrb[0].mxu0
  %255 = vmatprep.mubr.bf16.mxu0 0
  %256 = vmatmul.mubr.bf16.gmra.mrb[0].mxu0 %v105
  %v257 = vpop.f32.mrb[0].mxu0
  %v258 = vadd.f32 0.0, %v257
  %v259 = vpop.f32.mrb[0].mxu0
  %v260 = vpop.f32.mrb[0].mxu0
  %v261 = vadd.f32 0.0, %v260
  %v262 = vpop.f32.mrb[0].mxu0
  %263 = vmatprep.mubr.bf16.mxu0 0
  %264 = vmatmul.mubr.bf16.gmra.mrb[0].mxu0 %v106
  %v265 = vpop.f32.mrb[0].mxu0
  %v266 = vadd.f32 0.0, %v265
  %v267 = vpop.f32.mrb[0].mxu0
  %v268 = vpop.f32.mrb[0].mxu0
  %v269 = vadd.f32 0.0, %v268
  %v270 = vpop.f32.mrb[0].mxu0
  %271 = vmatprep.mubr.bf16.mxu0 0
  %272 = vmatmul.mubr.bf16.gmra.mrb[0].mxu0 %v107
  %v273 = vpop.f32.mrb[0].mxu0
  %v274 = vadd.f32 0.0, %v273
  %v275 = vpop.f32.mrb[0].mxu0
  %v276 = vpop.f32.mrb[0].mxu0
  %v277 = vadd.f32 0.0, %v276
  %v278 = vpop.f32.mrb[0].mxu0
  %279 = vmatprep.mubr.bf16.mxu0 0
  %280 = vmatmul.mubr.bf16.gmra.mrb[0].mxu0 %v108
  %v281 = vpop.f32.mrb[0].mxu0
  %v282 = vadd.f32 0.0, %v281
  %v283 = vpop.f32.mrb[0].mxu0
  %v284 = vpop.f32.mrb[0].mxu0
  %v285 = vadd.f32 0.0, %v284
  %v286 = vpop.f32.mrb[0].mxu0
  %287 = vmatprep.mubr.bf16.mxu0 0
  %288 = vmatmul.mubr.bf16.gmra.mrb[0].mxu0 %v109
  %v289 = vpop.f32.mrb[0].mxu0
  %v290 = vadd.f32 0.0, %v289
  %v291 = vpop.f32.mrb[0].mxu0
  %v292 = vpop.f32.mrb[0].mxu0
  %v293 = vadd.f32 0.0, %v292
  %v294 = vpop.f32.mrb[0].mxu0
  %295 = vmatprep.mubr.bf16.mxu0 0
  %296 = vmatmul.mubr.bf16.gmra.mrb[0].mxu0 %v110
  %v297 = vpop.f32.mrb[0].mxu0
  %v298 = vadd.f32 0.0, %v297
  %v299 = vpop.f32.mrb[0].mxu0
  %v300 = vpop.f32.mrb[0].mxu0
  %v301 = vadd.f32 0.0, %v300
  %v302 = vpop.f32.mrb[0].mxu0
  %303 = vdwg.mxu0
  %304 = vmatprep.subr.bf16.mxu0 0
  %305 = vmatpush1.bf16.msra.mxu0 %v191
  %306 = vmatprep.subr.bf16.mxu0 0
  %307 = vmatpush1.bf16.msra.mxu0 %v192
  %308 = vmatprep.subr.bf16.mxu0 0
  %309 = vmatpush1.bf16.msra.mxu0 %v193
  %310 = vmatprep.subr.bf16.mxu0 0
  %311 = vmatpush1.bf16.msra.mxu0 %v194
  %312 = vmatprep.subr.bf16.mxu0 0
  %313 = vmatpush1.bf16.msra.mxu0 %v195
  %314 = vmatprep.subr.bf16.mxu0 0
  %315 = vmatpush1.bf16.msra.mxu0 %v196
  %316 = vmatprep.subr.bf16.mxu0 0
  %317 = vmatpush1.bf16.msra.mxu0 %v197
  %318 = vmatprep.subr.bf16.mxu0 0
  %319 = vmatpush1.bf16.msra.mxu0 %v198
  %320 = vmatprep.subr.bf16.mxu0 0
  %321 = vmatpush1.bf16.msra.mxu0 0
  %322 = vmatprep.subr.bf16.mxu0 0
  %323 = vmatpush1.bf16.msra.mxu0 0
  %324 = vmatprep.subr.bf16.mxu0 0
  %325 = vmatpush1.bf16.msra.mxu0 0
  %326 = vmatprep.subr.bf16.mxu0 0
  %327 = vmatpush1.bf16.msra.mxu0 0
  %328 = vmatprep.subr.bf16.mxu0 0
  %329 = vmatpush1.bf16.msra.mxu0 0
  %330 = vmatprep.subr.bf16.mxu0 0
  %331 = vmatpush1.bf16.msra.mxu0 0
  %332 = vmatprep.subr.bf16.mxu0 0
  %333 = vmatpush1.bf16.msra.mxu0 0
  %334 = vmatprep.subr.bf16.mxu0 0
  %335 = vmatpush1.bf16.msra.mxu0 0
  %336 = vmatprep.mubr.bf16.mxu0 0
  %337 = vmatmul.mubr.bf16.gmra.mrb[0].mxu0 %v63
  %v338 = vpop.f32.mrb[0].mxu0
  %v339 = vadd.f32 %v242, %v338
  %v340 = vpop.f32.mrb[0].mxu0
  %v341 = vpop.f32.mrb[0].mxu0
  %v342 = vadd.f32 %v245, %v341
  %v343 = vpop.f32.mrb[0].mxu0
  %344 = vmatprep.mubr.bf16.mxu0 0
  %345 = vmatmul.mubr.bf16.gmra.mrb[0].mxu0 %v64
  %v346 = vpop.f32.mrb[0].mxu0
  %v347 = vadd.f32 %v250, %v346
  %v348 = vpop.f32.mrb[0].mxu0
  %v349 = vpop.f32.mrb[0].mxu0
  %v350 = vadd.f32 %v253, %v349
  %v351 = vpop.f32.mrb[0].mxu0
  %352 = vmatprep.mubr.bf16.mxu0 0
  %353 = vmatmul.mubr.bf16.gmra.mrb[0].mxu0 %v65
  %v354 = vpop.f32.mrb[0].mxu0
  %v355 = vadd.f32 %v258, %v354
  %v356 = vpop.f32.mrb[0].mxu0
  %v357 = vpop.f32.mrb[0].mxu0
  %v358 = vadd.f32 %v261, %v357
  %v359 = vpop.f32.mrb[0].mxu0
  %360 = vmatprep.mubr.bf16.mxu0 0
  %361 = vmatmul.mubr.bf16.gmra.mrb[0].mxu0 %v66
  %v362 = vpop.f32.mrb[0].mxu0
  %v363 = vadd.f32 %v266, %v362
  %v364 = vpop.f32.mrb[0].mxu0
  %v365 = vpop.f32.mrb[0].mxu0
  %v366 = vadd.f32 %v269, %v365
  %v367 = vpop.f32.mrb[0].mxu0
  %368 = vmatprep.mubr.bf16.mxu0 0
  %369 = vmatmul.mubr.bf16.gmra.mrb[0].mxu0 %v67
  %v370 = vpop.f32.mrb[0].mxu0
  %v371 = vadd.f32 %v274, %v370
  %v372 = vpop.f32.mrb[0].mxu0
  %v373 = vpop.f32.mrb[0].mxu0
  %v374 = vadd.f32 %v277, %v373
  %v375 = vpop.f32.mrb[0].mxu0
  %376 = vmatprep.mubr.bf16.mxu0 0
  %377 = vmatmul.mubr.bf16.gmra.mrb[0].mxu0 %v68
  %v378 = vpop.f32.mrb[0].mxu0
  %v379 = vadd.f32 %v282, %v378
  %v380 = vpop.f32.mrb[0].mxu0
  %v381 = vpop.f32.mrb[0].mxu0
  %v382 = vadd.f32 %v285, %v381
  %v383 = vpop.f32.mrb[0].mxu0
  %384 = vmatprep.mubr.bf16.mxu0 0
  %385 = vmatmul.mubr.bf16.gmra.mrb[0].mxu0 %v69
  %v386 = vpop.f32.mrb[0].mxu0
  %v387 = vadd.f32 %v290, %v386
  %v388 = vpop.f32.mrb[0].mxu0
  %v389 = vpop.f32.mrb[0].mxu0
  %v390 = vadd.f32 %v293, %v389
  %v391 = vpop.f32.mrb[0].mxu0
  %392 = vmatprep.mubr.bf16.mxu0 0
  %393 = vmatmul.mubr.bf16.gmra.mrb[0].mxu0 %v70
  %v394 = vpop.f32.mrb[0].mxu0
  %v395 = vadd.f32 %v298, %v394
  %v396 = vpop.f32.mrb[0].mxu0
  %v397 = vpop.f32.mrb[0].mxu0
  %v398 = vadd.f32 %v301, %v397
  %v399 = vpop.f32.mrb[0].mxu0
  %400 = vdwg.mxu0
  %401 = vmatprep.subr.bf16.mxu0 0
  %402 = vmatpush1.bf16.msra.mxu0 %v191
  %403 = vmatprep.subr.bf16.mxu0 0
  %404 = vmatpush1.bf16.msra.mxu0 %v192
  %405 = vmatprep.subr.bf16.mxu0 0
  %406 = vmatpush1.bf16.msra.mxu0 %v193
  %407 = vmatprep.subr.bf16.mxu0 0
  %408 = vmatpush1.bf16.msra.mxu0 %v194
  %409 = vmatprep.subr.bf16.mxu0 0
  %410 = vmatpush1.bf16.msra.mxu0 %v195
  %411 = vmatprep.subr.bf16.mxu0 0
  %412 = vmatpush1.bf16.msra.mxu0 %v196
  %413 = vmatprep.subr.bf16.mxu0 0
  %414 = vmatpush1.bf16.msra.mxu0 %v197
  %415 = vmatprep.subr.bf16.mxu0 0
  %416 = vmatpush1.bf16.msra.mxu0 %v198
  %417 = vmatprep.subr.bf16.mxu0 0
  %418 = vmatpush1.bf16.msra.mxu0 0
  %419 = vmatprep.subr.bf16.mxu0 0
  %420 = vmatpush1.bf16.msra.mxu0 0
  %421 = vmatprep.subr.bf16.mxu0 0
  %422 = vmatpush1.bf16.msra.mxu0 0
  %423 = vmatprep.subr.bf16.mxu0 0
  %424 = vmatpush1.bf16.msra.mxu0 0
  %425 = vmatprep.subr.bf16.mxu0 0
  %426 = vmatpush1.bf16.msra.mxu0 0
  %427 = vmatprep.subr.bf16.mxu0 0
  %428 = vmatpush1.bf16.msra.mxu0 0
  %429 = vmatprep.subr.bf16.mxu0 0
  %430 = vmatpush1.bf16.msra.mxu0 0
  %431 = vmatprep.subr.bf16.mxu0 0
  %432 = vmatpush1.bf16.msra.mxu0 0
  %433 = vmatprep.mubr.bf16.mxu0 0
  %434 = vmatmul.mubr.bf16.gmra.mrb[0].mxu0 %v151
  %v435 = vpop.f32.mrb[0].mxu0
  %v436 = vadd.f32 0.0, %v435
  %v437 = vpop.f32.mrb[0].mxu0
  %v438 = vpop.f32.mrb[0].mxu0
  %v439 = vadd.f32 0.0, %v438
  %v440 = vpop.f32.mrb[0].mxu0
  %441 = vmatprep.mubr.bf16.mxu0 0
  %442 = vmatmul.mubr.bf16.gmra.mrb[0].mxu0 %v152
  %v443 = vpop.f32.mrb[0].mxu0
  %v444 = vadd.f32 0.0, %v443
  %v445 = vpop.f32.mrb[0].mxu0
  %v446 = vpop.f32.mrb[0].mxu0
  %v447 = vadd.f32 0.0, %v446
  %v448 = vpop.f32.mrb[0].mxu0
  %449 = vmatprep.mubr.bf16.mxu0 0
  %450 = vmatmul.mubr.bf16.gmra.mrb[0].mxu0 %v153
  %v451 = vpop.f32.mrb[0].mxu0
  %v452 = vadd.f32 0.0, %v451
  %v453 = vpop.f32.mrb[0].mxu0
  %v454 = vpop.f32.mrb[0].mxu0
  %v455 = vadd.f32 0.0, %v454
  %v456 = vpop.f32.mrb[0].mxu0
  %457 = vmatprep.mubr.bf16.mxu0 0
  %458 = vmatmul.mubr.bf16.gmra.mrb[0].mxu0 %v154
  %v459 = vpop.f32.mrb[0].mxu0
  %v460 = vadd.f32 0.0, %v459
  %v461 = vpop.f32.mrb[0].mxu0
  %v462 = vpop.f32.mrb[0].mxu0
  %v463 = vadd.f32 0.0, %v462
  %v464 = vpop.f32.mrb[0].mxu0
  %465 = vmatprep.mubr.bf16.mxu0 0
  %466 = vmatmul.mubr.bf16.gmra.mrb[0].mxu0 %v155
  %v467 = vpop.f32.mrb[0].mxu0
  %v468 = vadd.f32 0.0, %v467
  %v469 = vpop.f32.mrb[0].mxu0
  %v470 = vpop.f32.mrb[0].mxu0
  %v471 = vadd.f32 0.0, %v470
  %v472 = vpop.f32.mrb[0].mxu0
  %473 = vmatprep.mubr.bf16.mxu0 0
  %474 = vmatmul.mubr.bf16.gmra.mrb[0].mxu0 %v156
  %v475 = vpop.f32.mrb[0].mxu0
  %v476 = vadd.f32 0.0, %v475
  %v477 = vpop.f32.mrb[0].mxu0
  %v478 = vpop.f32.mrb[0].mxu0
  %v479 = vadd.f32 0.0, %v478
  %v480 = vpop.f32.mrb[0].mxu0
  %481 = vmatprep.mubr.bf16.mxu0 0
  %482 = vmatmul.mubr.bf16.gmra.mrb[0].mxu0 %v157
  %v483 = vpop.f32.mrb[0].mxu0
  %v484 = vadd.f32 0.0, %v483
  %v485 = vpop.f32.mrb[0].mxu0
  %v486 = vpop.f32.mrb[0].mxu0
  %v487 = vadd.f32 0.0, %v486
  %v488 = vpop.f32.mrb[0].mxu0
  %489 = vmatprep.mubr.bf16.mxu0 0
  %490 = vmatmul.mubr.bf16.gmra.mrb[0].mxu0 %v158
  %v491 = vpop.f32.mrb[0].mxu0
  %v492 = vadd.f32 0.0, %v491
  %v493 = vpop.f32.mrb[0].mxu0
  %v494 = vpop.f32.mrb[0].mxu0
  %v495 = vadd.f32 0.0, %v494
  %v496 = vpop.f32.mrb[0].mxu0
  %497 = vdwg.mxu0
  %498 = vmatprep.subr.bf16.mxu0 0
  %499 = vmatpush1.bf16.msra.mxu0 %v191
  %500 = vmatprep.subr.bf16.mxu0 0
  %501 = vmatpush1.bf16.msra.mxu0 %v192
  %502 = vmatprep.subr.bf16.mxu0 0
  %503 = vmatpush1.bf16.msra.mxu0 %v193
  %504 = vmatprep.subr.bf16.mxu0 0
  %505 = vmatpush1.bf16.msra.mxu0 %v194
  %506 = vmatprep.subr.bf16.mxu0 0
  %507 = vmatpush1.bf16.msra.mxu0 %v195
  %508 = vmatprep.subr.bf16.mxu0 0
  %509 = vmatpush1.bf16.msra.mxu0 %v196
  %510 = vmatprep.subr.bf16.mxu0 0
  %511 = vmatpush1.bf16.msra.mxu0 %v197
  %512 = vmatprep.subr.bf16.mxu0 0
  %513 = vmatpush1.bf16.msra.mxu0 %v198
  %514 = vmatprep.subr.bf16.mxu0 0
  %515 = vmatpush1.bf16.msra.mxu0 0
  %516 = vmatprep.subr.bf16.mxu0 0
  %517 = vmatpush1.bf16.msra.mxu0 0
  %518 = vmatprep.subr.bf16.mxu0 0
  %519 = vmatpush1.bf16.msra.mxu0 0
  %520 = vmatprep.subr.bf16.mxu0 0
  %521 = vmatpush1.bf16.msra.mxu0 0
  %522 = vmatprep.subr.bf16.mxu0 0
  %523 = vmatpush1.bf16.msra.mxu0 0
  %524 = vmatprep.subr.bf16.mxu0 0
  %525 = vmatpush1.bf16.msra.mxu0 0
  %526 = vmatprep.subr.bf16.mxu0 0
  %527 = vmatpush1.bf16.msra.mxu0 0
  %528 = vmatprep.subr.bf16.mxu0 0
  %529 = vmatpush1.bf16.msra.mxu0 0
  %530 = vmatprep.mubr.bf16.mxu0 0
  %531 = vmatmul.mubr.bf16.gmra.mrb[0].mxu0 %v111
  %v532 = vpop.f32.mrb[0].mxu0
  %v533 = vadd.f32 %v436, %v532
  %v534 = vpop.f32.mrb[0].mxu0
  %v535 = vpop.f32.mrb[0].mxu0
  %v536 = vadd.f32 %v439, %v535
  %v537 = vpop.f32.mrb[0].mxu0
  %538 = vmatprep.mubr.bf16.mxu0 0
  %539 = vmatmul.mubr.bf16.gmra.mrb[0].mxu0 %v112
  %v540 = vpop.f32.mrb[0].mxu0
  %v541 = vadd.f32 %v444, %v540
  %v542 = vpop.f32.mrb[0].mxu0
  %v543 = vpop.f32.mrb[0].mxu0
  %v544 = vadd.f32 %v447, %v543
  %v545 = vpop.f32.mrb[0].mxu0
  %546 = vmatprep.mubr.bf16.mxu0 0
  %547 = vmatmul.mubr.bf16.gmra.mrb[0].mxu0 %v113
  %v548 = vpop.f32.mrb[0].mxu0
  %v549 = vadd.f32 %v452, %v548
  %v550 = vpop.f32.mrb[0].mxu0
  %v551 = vpop.f32.mrb[0].mxu0
  %v552 = vadd.f32 %v455, %v551
  %v553 = vpop.f32.mrb[0].mxu0
  %554 = vmatprep.mubr.bf16.mxu0 0
  %555 = vmatmul.mubr.bf16.gmra.mrb[0].mxu0 %v114
  %v556 = vpop.f32.mrb[0].mxu0
  %v557 = vadd.f32 %v460, %v556
  %v558 = vpop.f32.mrb[0].mxu0
  %v559 = vpop.f32.mrb[0].mxu0
  %v560 = vadd.f32 %v463, %v559
  %v561 = vpop.f32.mrb[0].mxu0
  %562 = vmatprep.mubr.bf16.mxu0 0
  %563 = vmatmul.mubr.bf16.gmra.mrb[0].mxu0 %v115
  %v564 = vpop.f32.mrb[0].mxu0
  %v565 = vadd.f32 %v468, %v564
  %v566 = vpop.f32.mrb[0].mxu0
  %v567 = vpop.f32.mrb[0].mxu0
  %v568 = vadd.f32 %v471, %v567
  %v569 = vpop.f32.mrb[0].mxu0
  %570 = vmatprep.mubr.bf16.mxu0 0
  %571 = vmatmul.mubr.bf16.gmra.mrb[0].mxu0 %v116
  %v572 = vpop.f32.mrb[0].mxu0
  %v573 = vadd.f32 %v476, %v572
  %v574 = vpop.f32.mrb[0].mxu0
  %v575 = vpop.f32.mrb[0].mxu0
  %v576 = vadd.f32 %v479, %v575
  %v577 = vpop.f32.mrb[0].mxu0
  %578 = vmatprep.mubr.bf16.mxu0 0
  %579 = vmatmul.mubr.bf16.gmra.mrb[0].mxu0 %v117
  %v580 = vpop.f32.mrb[0].mxu0
  %v581 = vadd.f32 %v484, %v580
  %v582 = vpop.f32.mrb[0].mxu0
  %v583 = vpop.f32.mrb[0].mxu0
  %v584 = vadd.f32 %v487, %v583
  %v585 = vpop.f32.mrb[0].mxu0
  %586 = vmatprep.mubr.bf16.mxu0 0
  %587 = vmatmul.mubr.bf16.gmra.mrb[0].mxu0 %v118
  %v588 = vpop.f32.mrb[0].mxu0
  %v589 = vadd.f32 %v492, %v588
  %v590 = vpop.f32.mrb[0].mxu0
  %v591 = vpop.f32.mrb[0].mxu0
  %v592 = vadd.f32 %v495, %v591
  %v593 = vpop.f32.mrb[0].mxu0
  %594 = vdwg.mxu0
  %v595 = vmul.f32 %v339, 0.03125
  %v596 = vmul.f32 %v342, 0.03125
  %v597 = vmul.f32 %v347, 0.03125
  %v598 = vmul.f32 %v350, 0.03125
  %v599 = vmul.f32 %v355, 0.03125
  %v600 = vmul.f32 %v358, 0.03125
  %v601 = vmul.f32 %v363, 0.03125
  %v602 = vmul.f32 %v366, 0.03125
  %v603 = vmul.f32 %v371, 0.03125
  %v604 = vmul.f32 %v374, 0.03125
  %v605 = vmul.f32 %v379, 0.03125
  %v606 = vmul.f32 %v382, 0.03125
  %v607 = vmul.f32 %v387, 0.03125
  %v608 = vmul.f32 %v390, 0.03125
  %v609 = vmul.f32 %v395, 0.03125
  %v610 = vmul.f32 %v398, 0.03125
  %v611 = vmul.f32 %v533, 0.03125
  %v612 = vmul.f32 %v536, 0.03125
  %v613 = vmul.f32 %v541, 0.03125
  %v614 = vmul.f32 %v544, 0.03125
  %v615 = vmul.f32 %v549, 0.03125
  %v616 = vmul.f32 %v552, 0.03125
  %v617 = vmul.f32 %v557, 0.03125
  %v618 = vmul.f32 %v560, 0.03125
  %v619 = vmul.f32 %v565, 0.03125
  %v620 = vmul.f32 %v568, 0.03125
  %v621 = vmul.f32 %v573, 0.03125
  %v622 = vmul.f32 %v576, 0.03125
  %v623 = vmul.f32 %v581, 0.03125
  %v624 = vmul.f32 %v584, 0.03125
  %v625 = vmul.f32 %v589, 0.03125
  %v626 = vmul.f32 %v592, 0.03125
  %v627 = vmul.f32 %v595, %v595
  %v628 = vmul.f32 %v596, %v596
  %v629 = vmul.f32 %v597, %v597
  %v630 = vmul.f32 %v598, %v598
  %v631 = vmul.f32 %v599, %v599
  %v632 = vmul.f32 %v600, %v600
  %v633 = vmul.f32 %v601, %v601
  %v634 = vmul.f32 %v602, %v602
  %v635 = vmul.f32 %v603, %v603
  %v636 = vmul.f32 %v604, %v604
  %v637 = vmul.f32 %v605, %v605
  %v638 = vmul.f32 %v606, %v606
  %v639 = vmul.f32 %v607, %v607
  %v640 = vmul.f32 %v608, %v608
  %v641 = vmul.f32 %v609, %v609
  %v642 = vmul.f32 %v610, %v610
  %v643 = vsub.f32 %v611, %v627
  %v644 = vsub.f32 %v612, %v628
  %v645 = vsub.f32 %v613, %v629
  %v646 = vsub.f32 %v614, %v630
  %v647 = vsub.f32 %v615, %v631
  %v648 = vsub.f32 %v616, %v632
  %v649 = vsub.f32 %v617, %v633
  %v650 = vsub.f32 %v618, %v634
  %v651 = vsub.f32 %v619, %v635
  %v652 = vsub.f32 %v620, %v636
  %v653 = vsub.f32 %v621, %v637
  %v654 = vsub.f32 %v622, %v638
  %v655 = vsub.f32 %v623, %v639
  %v656 = vsub.f32 %v624, %v640
  %v657 = vsub.f32 %v625, %v641
  %v658 = vsub.f32 %v626, %v642
  %v659 = vmax.f32 %v643, 0.0
  %v660 = vmax.f32 %v644, 0.0
  %v661 = vmax.f32 %v645, 0.0
  %v662 = vmax.f32 %v646, 0.0
  %v663 = vmax.f32 %v647, 0.0
  %v664 = vmax.f32 %v648, 0.0
  %v665 = vmax.f32 %v649, 0.0
  %v666 = vmax.f32 %v650, 0.0
  %v667 = vmax.f32 %v651, 0.0
  %v668 = vmax.f32 %v652, 0.0
  %v669 = vmax.f32 %v653, 0.0
  %v670 = vmax.f32 %v654, 0.0
  %v671 = vmax.f32 %v655, 0.0
  %v672 = vmax.f32 %v656, 0.0
  %v673 = vmax.f32 %v657, 0.0
  %v674 = vmax.f32 %v658, 0.0
  %v675 = vadd.f32 %v659, 1e-05
  %v676 = vadd.f32 %v660, 1e-05
  %v677 = vadd.f32 %v661, 1e-05
  %v678 = vadd.f32 %v662, 1e-05
  %v679 = vadd.f32 %v663, 1e-05
  %v680 = vadd.f32 %v664, 1e-05
  %v681 = vadd.f32 %v665, 1e-05
  %v682 = vadd.f32 %v666, 1e-05
  %v683 = vadd.f32 %v667, 1e-05
  %v684 = vadd.f32 %v668, 1e-05
  %v685 = vadd.f32 %v669, 1e-05
  %v686 = vadd.f32 %v670, 1e-05
  %v687 = vadd.f32 %v671, 1e-05
  %v688 = vadd.f32 %v672, 1e-05
  %v689 = vadd.f32 %v673, 1e-05
  %v690 = vadd.f32 %v674, 1e-05
  %v691 = vrsqrt.pop %v675
  %v692 = vrsqrt.pop %v676
  %v693 = vrsqrt.pop %v677
  %v694 = vrsqrt.pop %v678
  %v695 = vrsqrt.pop %v679
  %v696 = vrsqrt.pop %v680
  %v697 = vrsqrt.pop %v681
  %v698 = vrsqrt.pop %v682
  %v699 = vrsqrt.pop %v683
  %v700 = vrsqrt.pop %v684
  %v701 = vrsqrt.pop %v685
  %v702 = vrsqrt.pop %v686
  %v703 = vrsqrt.pop %v687
  %v704 = vrsqrt.pop %v688
  %v705 = vrsqrt.pop %v689
  %v706 = vrsqrt.pop %v690
  %v707 = vmul.f32 %v15, %v691
  %v708 = vmul.f32 %v16, %v692
  %v709 = vmul.f32 %v17, %v693
  %v710 = vmul.f32 %v18, %v694
  %v711 = vmul.f32 %v19, %v695
  %v712 = vmul.f32 %v20, %v696
  %v713 = vmul.f32 %v21, %v697
  %v714 = vmul.f32 %v22, %v698
  %v715 = vmul.f32 %v23, %v699
  %v716 = vmul.f32 %v24, %v700
  %v717 = vmul.f32 %v25, %v701
  %v718 = vmul.f32 %v26, %v702
  %v719 = vmul.f32 %v27, %v703
  %v720 = vmul.f32 %v28, %v704
  %v721 = vmul.f32 %v29, %v705
  %v722 = vmul.f32 %v30, %v706
  %v723 = vld [vmem:[%s1] sm:$0x1]
  %v725 = vlaneseq
  %v726 = vshrl.u32 %v725, 7
  %v727 = vsub.s32 0, %v726
  %v728 = vrot.slane %v723, %v727
  %v730 = vmul.f32 %v707, %v728
  %v731 = vmul.f32 %v708, %v728
  %v732 = vmul.f32 %v709, %v728
  %v733 = vmul.f32 %v710, %v728
  %v734 = vmul.f32 %v711, %v728
  %v735 = vmul.f32 %v712, %v728
  %v736 = vmul.f32 %v713, %v728
  %v737 = vmul.f32 %v714, %v728
  %v738 = vmul.f32 %v715, %v728
  %v739 = vmul.f32 %v716, %v728
  %v740 = vmul.f32 %v717, %v728
  %v741 = vmul.f32 %v718, %v728
  %v742 = vmul.f32 %v719, %v728
  %v743 = vmul.f32 %v720, %v728
  %v744 = vmul.f32 %v721, %v728
  %v745 = vmul.f32 %v722, %v728
  %746 = vst [vmem:[%s3] sm:$0xff] %v730
  %747 = vst [vmem:[%s3 + $0x8] sm:$0xff] %v731
  %748 = vst [vmem:[%s3 + $0x10] sm:$0xff] %v732
  %749 = vst [vmem:[%s3 + $0x18] sm:$0xff] %v733
  %750 = vst [vmem:[%s3 + $0x20] sm:$0xff] %v734
  %751 = vst [vmem:[%s3 + $0x28] sm:$0xff] %v735
  %752 = vst [vmem:[%s3 + $0x30] sm:$0xff] %v736
  %753 = vst [vmem:[%s3 + $0x38] sm:$0xff] %v737
  %754 = vst [vmem:[%s3 + $0x40] sm:$0xff] %v738
  %755 = vst [vmem:[%s3 + $0x48] sm:$0xff] %v739
  %756 = vst [vmem:[%s3 + $0x50] sm:$0xff] %v740
  %757 = vst [vmem:[%s3 + $0x58] sm:$0xff] %v741
  %758 = vst [vmem:[%s3 + $0x60] sm:$0xff] %v742
  %759 = vst [vmem:[%s3 + $0x68] sm:$0xff] %v743
  %760 = vst [vmem:[%s3 + $0x70] sm:$0xff] %v744
  %761 = vst [vmem:[%s3 + $0x78] sm:$0xff] %v745
  // Predicated region
  $region14: #{biasfree_layernorm.1} parent=0 // pred_check
    _
  $region15: #{biasfree_layernorm.1} parent=0 // pred_check_branch
    %763 = sbr.rel (0) target = $region17
  $region16: #{biasfree_layernorm.1} parent=0 // pred_region
    _
  $region17: #{biasfree_layernorm.1} parent=0 // pred_fallthru
    _
  // Predicated region
  $region18: #{biasfree_layernorm.1} parent=0 // pred_check
    _
  $region19: #{biasfree_layernorm.1} parent=0 // pred_check_branch
    %765 = sbr.rel (0) target = $region21
  $region20: #{biasfree_layernorm.1} parent=0 // pred_region
    _
  $region21: #{biasfree_layernorm.1} parent=0 // pred_fallthru
    _

</llo_original>
